<compile_context>
chip_gen: v7x
topology: tpu7x:2x2x1
jax: 0.10.0
libtpu: 0.0.40
codegen_flags: <defaults>
</compile_context>

<pallas_src>
import jax
import jax.numpy as jnp
from jax.experimental import pallas as pl
from jax.experimental.pallas import tpu as pltpu

# ----------------------------- model config ---------------------------------
IN_FEAT    = 6
OUT_FEAT   = 4
HIDDEN     = 32
NUM_BLOCKS = 2
# context_features=None, dropout_probability=0, use_batch_norm=False, activation=ELU

BATCH   = 64            # total rows the loss is averaged over
TILE_B  = 16            # batch rows per grid step (sublane-aligned, divides BATCH)
NUM_TILES = BATCH // TILE_B
assert TILE_B % 8 == 0 and BATCH % TILE_B == 0

LANES   = 128           # lane width of the packed slabs / hidden activations
IN_PAD  = 8             # x padded to 8 features so the first matmul K is sublane-aligned
LOG_2PI = 1.8378770664093453

# ---- packed weight-slab row offsets (HIDDEN-row stride, all 8-sublane aligned) ----
ROW_INIT = 0                                         # init weight: rows 0..5 valid, 6..7 zero
def ROW_B0(k): return IN_PAD + 2 * k * HIDDEN        # block k, linear[0]
def ROW_B1(k): return IN_PAD + 2 * k * HIDDEN + HIDDEN
ROW_OUT  = IN_PAD + 2 * NUM_BLOCKS * HIDDEN          # fused [mu | logvar] weight
W_ROWS   = ROW_OUT + HIDDEN                          # 8 + 2*2*32 + 32 = 168 rows total

# ---- packed bias-slab rows (each bias pre-replicated across TILE_B sublanes) ------
BROW_INIT = 0
def BROW_B0(k): return (1 + 2 * k) * TILE_B
def BROW_B1(k): return (2 + 2 * k) * TILE_B
BROW_OUT  = (1 + 2 * NUM_BLOCKS) * TILE_B
B_ROWS    = (2 + 2 * NUM_BLOCKS) * TILE_B            # scales with NUM_BLOCKS -> no silent clamp


def _elu(x):
    # F.elu with alpha=1.0; elu(0)=0 so zero-padded lanes stay zero.
    # TODO(synk): expm1 would be numerically nicer for small negative x, but we keep
    # the exp form to match the in-file reference numerics and proven lowering.
    return jnp.where(x > 0, x, jnp.exp(jnp.minimum(x, 0.0)) - 1.0)


# ------------------------------ Pallas kernel --------------------------------
def residualnet_loss_kernel(x_ref, y_ref, w_ref, b_ref, loss_ref):
    x = x_ref[...]                                            # (TILE_B, IN_PAD) f32
    y = y_ref[...]                                            # (TILE_B, OUT_FEAT) f32

    # initial layer: (TILE_B, 8) @ (8, 128) -> (TILE_B, 128); lanes >= HIDDEN are zero
    h = jnp.dot(x, w_ref[pl.ds(ROW_INIT, IN_PAD), :],
                preferred_element_type=jnp.float32)
    h = h + b_ref[pl.ds(BROW_INIT, TILE_B), :]

    # residual blocks (unrolled; NUM_BLOCKS is small and static)
    for k in range(NUM_BLOCKS):
        t = _elu(h[:, :HIDDEN])                               # (TILE_B, 32)
        t = jnp.dot(t, w_ref[pl.ds(ROW_B0(k), HIDDEN), :],
                    preferred_element_type=jnp.float32)
        t = t + b_ref[pl.ds(BROW_B0(k), TILE_B), :]
        t = _elu(t[:, :HIDDEN])
        # dropout(p=0) is identity
        t = jnp.dot(t, w_ref[pl.ds(ROW_B1(k), HIDDEN), :],
                    preferred_element_type=jnp.float32)
        t = t + b_ref[pl.ds(BROW_B1(k), TILE_B), :]
        h = h + t                                             # padded lanes stay zero

    # fused output head: one matmul producing [mu | logvar] in lanes 0:2*OUT_FEAT
    out = jnp.dot(h[:, :HIDDEN], w_ref[pl.ds(ROW_OUT, HIDDEN), :],
                  preferred_element_type=jnp.float32)
    out = out + b_ref[pl.ds(BROW_OUT, TILE_B), :]
    mu     = out[:, 0:OUT_FEAT]
    logvar = out[:, OUT_FEAT:2 * OUT_FEAT]

    # Independent(Normal(mu, exp(0.5*logvar)), 1).log_prob(y), multiply form:
    #   log_prob = -0.5 * ((y-mu)^2 * exp(-logvar) + logvar + log(2*pi))
    diff = y - mu
    neg2_logp = diff * diff * jnp.exp(-logvar) + logvar + LOG_2PI
    tile_loss = 0.5 * jnp.sum(neg2_logp) * jnp.float32(1.0 / BATCH)

    # Accumulate the scalar loss across batch tiles in the SMEM output.
    @pl.when(pl.program_id(0) == 0)
    def _():
        loss_ref[0, 0] = jnp.float32(0.0)

    loss_ref[0, 0] += tile_loss


# ------------------------------- wrapper --------------------------------------
def _residualnet_loss_impl(y, x, w_slab, b_slab):
    """Equivalent of ResidualNet.forward(y, x) -> scalar loss (normalization is identity)."""
    # Zero-pad x to 8 features outside the kernel (sublane-aligned K for the first dot).
    x_pad = jnp.zeros((BATCH, IN_PAD), jnp.float32).at[:, :IN_FEAT].set(x)

    out = pl.pallas_call(
        residualnet_loss_kernel,
        out_shape=jax.ShapeDtypeStruct((1, 1), jnp.float32),
        grid_spec=pltpu.PrefetchScalarGridSpec(
            num_scalar_prefetch=0,
            grid=(NUM_TILES,),
            in_specs=[
                pl.BlockSpec((TILE_B, IN_PAD), lambda i: (i, 0)),     # x batch tile
                pl.BlockSpec((TILE_B, OUT_FEAT), lambda i: (i, 0)),   # y batch tile
                pl.BlockSpec((W_ROWS, LANES), lambda i: (0, 0)),      # weights: VMEM-resident
                pl.BlockSpec((B_ROWS, LANES), lambda i: (0, 0)),      # biases:  VMEM-resident
            ],
            # Scalar accumulator lives in SMEM (no padded (8,128) VMEM tile writeback).
            out_specs=pl.BlockSpec(memory_space=pltpu.MemorySpace.SMEM),
        ),
        compiler_params=pltpu.CompilerParams(
            # Batch axis is a reduction into a single accumulator -> "arbitrary".
            # (Per-tile partial outputs + outside reduce would allow "parallel" on v7x.)
            dimension_semantics=("arbitrary",),
            vmem_limit_bytes=32 * 1024 * 1024,
        ),
    )(x_pad, y, w_slab, b_slab)
    return out[0, 0]


residualnet_forward_loss = jax.jit(_residualnet_loss_impl)


# -------------------- pack parameters into lane-dense slabs ------------------
def pack_params(p):
    """One-time packing (outside the per-call path): 10 arrays -> 2 slabs."""
    W = jnp.zeros((W_ROWS, LANES), jnp.float32)
    W = W.at[ROW_INIT:ROW_INIT + IN_FEAT, :HIDDEN].set(p["iw"])   # rows 6..7 stay zero
    for k in range(NUM_BLOCKS):
        W = W.at[ROW_B0(k):ROW_B0(k) + HIDDEN, :HIDDEN].set(p["bw0"][k])
        W = W.at[ROW_B1(k):ROW_B1(k) + HIDDEN, :HIDDEN].set(p["bw1"][k])
    ow = jnp.concatenate([p["mw"], p["lw"]], axis=1)              # (H, 2*OUT) fused head
    W = W.at[ROW_OUT:ROW_OUT + HIDDEN, :2 * OUT_FEAT].set(ow)

    B = jnp.zeros((B_ROWS, LANES), jnp.float32)

    def put(Bacc, row, vec):
        vec = vec.reshape(1, -1)
        n = vec.shape[1]
        return Bacc.at[row:row + TILE_B, :n].set(jnp.broadcast_to(vec, (TILE_B, n)))

    B = put(B, BROW_INIT, p["ib"])
    for k in range(NUM_BLOCKS):
        B = put(B, BROW_B0(k), p["bb0"][k])
        B = put(B, BROW_B1(k), p["bb1"][k])
    ob = jnp.concatenate([p["mb"], p["lb"]], axis=1)              # (1, 2*OUT)
    B = put(B, BROW_OUT, ob)
    return W, B


# ------------------------- deterministic parameter init ----------------------
def init_params(key):
    ks = jax.random.split(key, 12)

    def unif(k, shape, bound):
        return jax.random.uniform(k, shape, jnp.float32, -bound, bound)

    # rough analogue of PyTorch Linear default init (uniform +/- 1/sqrt(fan_in))
    return {
        "iw": unif(ks[0], (IN_FEAT, HIDDEN), 1.0 / jnp.sqrt(IN_FEAT)),
        "ib": unif(ks[1], (1, HIDDEN), 1.0 / jnp.sqrt(IN_FEAT)),
        # block linear[0]: default init
        "bw0": unif(ks[2], (NUM_BLOCKS, HIDDEN, HIDDEN), 1.0 / jnp.sqrt(HIDDEN)),
        "bb0": unif(ks[3], (NUM_BLOCKS, 1, HIDDEN), 1.0 / jnp.sqrt(HIDDEN)),
        # block linear[1]: zero_initialization -> uniform(-0.001, 0.001)
        "bw1": unif(ks[4], (NUM_BLOCKS, HIDDEN, HIDDEN), 0.001),
        "bb1": unif(ks[5], (NUM_BLOCKS, 1, HIDDEN), 0.001),
        "mw": unif(ks[6], (HIDDEN, OUT_FEAT), 1.0 / jnp.sqrt(HIDDEN)),
        "mb": unif(ks[7], (1, OUT_FEAT), 1.0 / jnp.sqrt(HIDDEN)),
        "lw": unif(ks[8], (HIDDEN, OUT_FEAT), 1.0 / jnp.sqrt(HIDDEN)),
        "lb": unif(ks[9], (1, OUT_FEAT), 1.0 / jnp.sqrt(HIDDEN)),
    }


# ------------------------------ pure-JAX reference ---------------------------
def reference_loss(y, x, p):
    h = x @ p["iw"] + p["ib"]
    for k in range(NUM_BLOCKS):
        t = _elu(h)
        t = t @ p["bw0"][k] + p["bb0"][k]
        t = _elu(t)
        t = t @ p["bw1"][k] + p["bb1"][k]
        h = h + t
    mu = h @ p["mw"] + p["mb"]
    logvar = h @ p["lw"] + p["lb"]
    var = jnp.exp(logvar)
    lp = -0.5 * (y - mu) ** 2 / var - 0.5 * logvar - 0.5 * jnp.log(2.0 * jnp.pi)
    return -jnp.mean(jnp.sum(lp, axis=-1))


# ----------------------------------- main ------------------------------------
if __name__ == "__main__":
    key = jax.random.PRNGKey(0)
    kp, kx, ky = jax.random.split(key, 3)

    params = init_params(kp)
    w_slab, b_slab = pack_params(params)   # one-time packing, not in the hot path

    x = jax.random.normal(kx, (BATCH, IN_FEAT), jnp.float32)
    y = jax.random.normal(ky, (BATCH, OUT_FEAT), jnp.float32)

    loss = jax.block_until_ready(residualnet_forward_loss(y, x, w_slab, b_slab))
    ref = jax.block_until_ready(reference_loss(y, x, params))

    assert jnp.isfinite(loss), "kernel produced non-finite loss"
    assert jnp.allclose(loss, ref, rtol=1e-4, atol=1e-4), (loss, ref)

    print("KERNEL_OK")
</pallas_src>

<mosaic_0001>
module attributes {stable_mosaic.version = 11 : i64} {
  func.func @residualnet_loss_kernel(%arg0: i32, %arg1: memref<16x8xf32, #tpu.memory_space<vmem>>, %arg2: memref<16x4xf32, #tpu.memory_space<vmem>>, %arg3: memref<168x128xf32, #tpu.memory_space<vmem>>, %arg4: memref<96x128xf32, #tpu.memory_space<vmem>>, %arg5: memref<1x1xf32, #tpu.memory_space<smem>>) attributes {dimension_semantics = [#tpu.dimension_semantics<arbitrary>], iteration_bounds = array<i64: 4>, scalar_prefetch = 0 : i64, scratch_operands = 0 : i64, tpu.core_type = #tpu.core_type<tc>, window_params = [{transform_indices = @transform_0, window_bounds = array<i64: 16, 8>}, {transform_indices = @transform_1, window_bounds = array<i64: 16, 4>}, {pipeline_mode = #tpu.pipeline_mode<synchronous>, transform_indices = @transform_2, window_bounds = array<i64: 168, 128>}, {pipeline_mode = #tpu.pipeline_mode<synchronous>, transform_indices = @transform_3, window_bounds = array<i64: 96, 128>}, {transform_indices = @transform_4, window_bounds = array<i64: 1, 1>}]} {
    %c0 = arith.constant 0 : index
    %c0_0 = arith.constant 0 : index
    %0 = vector.load %arg1[%c0, %c0_0] : memref<16x8xf32, #tpu.memory_space<vmem>>, vector<16x8xf32>
    %c0_1 = arith.constant 0 : index
    %c0_2 = arith.constant 0 : index
    %1 = vector.load %arg2[%c0_1, %c0_2] : memref<16x4xf32, #tpu.memory_space<vmem>>, vector<16x4xf32>
    %c0_3 = arith.constant 0 : index
    %c0_4 = arith.constant 0 : index
    %2 = vector.load %arg3[%c0_3, %c0_4] : memref<168x128xf32, #tpu.memory_space<vmem>>, vector<8x128xf32>
    %cst = arith.constant dense<0.000000e+00> : vector<16x128xf32>
    %3 = tpu.matmul %0, %2, %cst {dimension_numbers = #tpu.dot_dimension_numbers<[1], [0], [0], [1], [0, 0, 1, 1], [], []>} : vector<16x8xf32>, vector<8x128xf32>, vector<16x128xf32> -> vector<16x128xf32>
    %c0_5 = arith.constant 0 : index
    %c0_6 = arith.constant 0 : index
    %4 = vector.load %arg4[%c0_5, %c0_6] : memref<96x128xf32, #tpu.memory_space<vmem>>, vector<16x128xf32>
    %5 = arith.addf %3, %4 : vector<16x128xf32>
    %6 = vector.extract_strided_slice %5 {offsets = [0, 0], sizes = [16, 32], strides = [1, 1]} : vector<16x128xf32> to vector<16x32xf32>
    %cst_7 = arith.constant 0.000000e+00 : f32
    %7 = vector.broadcast %cst_7 : f32 to vector<16x32xf32>
    %8 = arith.cmpf ogt, %6, %7 : vector<16x32xf32>
    %cst_8 = arith.constant 0.000000e+00 : f32
    %9 = vector.broadcast %cst_8 : f32 to vector<16x32xf32>
    %10 = arith.minimumf %6, %9 : vector<16x32xf32>
    %11 = math.exp %10 : vector<16x32xf32>
    %cst_9 = arith.constant 1.000000e+00 : f32
    %12 = vector.broadcast %cst_9 : f32 to vector<16x32xf32>
    %13 = arith.subf %11, %12 : vector<16x32xf32>
    %14 = arith.select %8, %6, %13 : vector<16x32xi1>, vector<16x32xf32>
    %c8 = arith.constant 8 : index
    %c0_10 = arith.constant 0 : index
    %15 = vector.load %arg3[%c8, %c0_10] : memref<168x128xf32, #tpu.memory_space<vmem>>, vector<32x128xf32>
    %cst_11 = arith.constant dense<0.000000e+00> : vector<16x128xf32>
    %16 = tpu.matmul %14, %15, %cst_11 {dimension_numbers = #tpu.dot_dimension_numbers<[1], [0], [0], [1], [0, 0, 1, 1], [], []>} : vector<16x32xf32>, vector<32x128xf32>, vector<16x128xf32> -> vector<16x128xf32>
    %c16 = arith.constant 16 : index
    %c0_12 = arith.constant 0 : index
    %17 = vector.load %arg4[%c16, %c0_12] : memref<96x128xf32, #tpu.memory_space<vmem>>, vector<16x128xf32>
    %18 = arith.addf %16, %17 : vector<16x128xf32>
    %19 = vector.extract_strided_slice %18 {offsets = [0, 0], sizes = [16, 32], strides = [1, 1]} : vector<16x128xf32> to vector<16x32xf32>
    %cst_13 = arith.constant 0.000000e+00 : f32
    %20 = vector.broadcast %cst_13 : f32 to vector<16x32xf32>
    %21 = arith.cmpf ogt, %19, %20 : vector<16x32xf32>
    %cst_14 = arith.constant 0.000000e+00 : f32
    %22 = vector.broadcast %cst_14 : f32 to vector<16x32xf32>
    %23 = arith.minimumf %19, %22 : vector<16x32xf32>
    %24 = math.exp %23 : vector<16x32xf32>
    %cst_15 = arith.constant 1.000000e+00 : f32
    %25 = vector.broadcast %cst_15 : f32 to vector<16x32xf32>
    %26 = arith.subf %24, %25 : vector<16x32xf32>
    %27 = arith.select %21, %19, %26 : vector<16x32xi1>, vector<16x32xf32>
    %c40 = arith.constant 40 : index
    %c0_16 = arith.constant 0 : index
    %28 = vector.load %arg3[%c40, %c0_16] : memref<168x128xf32, #tpu.memory_space<vmem>>, vector<32x128xf32>
    %cst_17 = arith.constant dense<0.000000e+00> : vector<16x128xf32>
    %29 = tpu.matmul %27, %28, %cst_17 {dimension_numbers = #tpu.dot_dimension_numbers<[1], [0], [0], [1], [0, 0, 1, 1], [], []>} : vector<16x32xf32>, vector<32x128xf32>, vector<16x128xf32> -> vector<16x128xf32>
    %c32 = arith.constant 32 : index
    %c0_18 = arith.constant 0 : index
    %30 = vector.load %arg4[%c32, %c0_18] : memref<96x128xf32, #tpu.memory_space<vmem>>, vector<16x128xf32>
    %31 = arith.addf %29, %30 : vector<16x128xf32>
    %32 = arith.addf %5, %31 : vector<16x128xf32>
    %33 = vector.extract_strided_slice %32 {offsets = [0, 0], sizes = [16, 32], strides = [1, 1]} : vector<16x128xf32> to vector<16x32xf32>
    %cst_19 = arith.constant 0.000000e+00 : f32
    %34 = vector.broadcast %cst_19 : f32 to vector<16x32xf32>
    %35 = arith.cmpf ogt, %33, %34 : vector<16x32xf32>
    %cst_20 = arith.constant 0.000000e+00 : f32
    %36 = vector.broadcast %cst_20 : f32 to vector<16x32xf32>
    %37 = arith.minimumf %33, %36 : vector<16x32xf32>
    %38 = math.exp %37 : vector<16x32xf32>
    %cst_21 = arith.constant 1.000000e+00 : f32
    %39 = vector.broadcast %cst_21 : f32 to vector<16x32xf32>
    %40 = arith.subf %38, %39 : vector<16x32xf32>
    %41 = arith.select %35, %33, %40 : vector<16x32xi1>, vector<16x32xf32>
    %c72 = arith.constant 72 : index
    %c0_22 = arith.constant 0 : index
    %42 = vector.load %arg3[%c72, %c0_22] : memref<168x128xf32, #tpu.memory_space<vmem>>, vector<32x128xf32>
    %cst_23 = arith.constant dense<0.000000e+00> : vector<16x128xf32>
    %43 = tpu.matmul %41, %42, %cst_23 {dimension_numbers = #tpu.dot_dimension_numbers<[1], [0], [0], [1], [0, 0, 1, 1], [], []>} : vector<16x32xf32>, vector<32x128xf32>, vector<16x128xf32> -> vector<16x128xf32>
    %c48 = arith.constant 48 : index
    %c0_24 = arith.constant 0 : index
    %44 = vector.load %arg4[%c48, %c0_24] : memref<96x128xf32, #tpu.memory_space<vmem>>, vector<16x128xf32>
    %45 = arith.addf %43, %44 : vector<16x128xf32>
    %46 = vector.extract_strided_slice %45 {offsets = [0, 0], sizes = [16, 32], strides = [1, 1]} : vector<16x128xf32> to vector<16x32xf32>
    %cst_25 = arith.constant 0.000000e+00 : f32
    %47 = vector.broadcast %cst_25 : f32 to vector<16x32xf32>
    %48 = arith.cmpf ogt, %46, %47 : vector<16x32xf32>
    %cst_26 = arith.constant 0.000000e+00 : f32
    %49 = vector.broadcast %cst_26 : f32 to vector<16x32xf32>
    %50 = arith.minimumf %46, %49 : vector<16x32xf32>
    %51 = math.exp %50 : vector<16x32xf32>
    %cst_27 = arith.constant 1.000000e+00 : f32
    %52 = vector.broadcast %cst_27 : f32 to vector<16x32xf32>
    %53 = arith.subf %51, %52 : vector<16x32xf32>
    %54 = arith.select %48, %46, %53 : vector<16x32xi1>, vector<16x32xf32>
    %c104 = arith.constant 104 : index
    %c0_28 = arith.constant 0 : index
    %55 = vector.load %arg3[%c104, %c0_28] : memref<168x128xf32, #tpu.memory_space<vmem>>, vector<32x128xf32>
    %cst_29 = arith.constant dense<0.000000e+00> : vector<16x128xf32>
    %56 = tpu.matmul %54, %55, %cst_29 {dimension_numbers = #tpu.dot_dimension_numbers<[1], [0], [0], [1], [0, 0, 1, 1], [], []>} : vector<16x32xf32>, vector<32x128xf32>, vector<16x128xf32> -> vector<16x128xf32>
    %c64 = arith.constant 64 : index
    %c0_30 = arith.constant 0 : index
    %57 = vector.load %arg4[%c64, %c0_30] : memref<96x128xf32, #tpu.memory_space<vmem>>, vector<16x128xf32>
    %58 = arith.addf %56, %57 : vector<16x128xf32>
    %59 = arith.addf %32, %58 : vector<16x128xf32>
    %60 = vector.extract_strided_slice %59 {offsets = [0, 0], sizes = [16, 32], strides = [1, 1]} : vector<16x128xf32> to vector<16x32xf32>
    %c136 = arith.constant 136 : index
    %c0_31 = arith.constant 0 : index
    %61 = vector.load %arg3[%c136, %c0_31] : memref<168x128xf32, #tpu.memory_space<vmem>>, vector<32x128xf32>
    %cst_32 = arith.constant dense<0.000000e+00> : vector<16x128xf32>
    %62 = tpu.matmul %60, %61, %cst_32 {dimension_numbers = #tpu.dot_dimension_numbers<[1], [0], [0], [1], [0, 0, 1, 1], [], []>} : vector<16x32xf32>, vector<32x128xf32>, vector<16x128xf32> -> vector<16x128xf32>
    %c80 = arith.constant 80 : index
    %c0_33 = arith.constant 0 : index
    %63 = vector.load %arg4[%c80, %c0_33] : memref<96x128xf32, #tpu.memory_space<vmem>>, vector<16x128xf32>
    %64 = arith.addf %62, %63 : vector<16x128xf32>
    %65 = vector.extract_strided_slice %64 {offsets = [0, 0], sizes = [16, 4], strides = [1, 1]} : vector<16x128xf32> to vector<16x4xf32>
    %66 = vector.extract_strided_slice %64 {offsets = [0, 4], sizes = [16, 4], strides = [1, 1]} : vector<16x128xf32> to vector<16x4xf32>
    %67 = arith.subf %1, %65 : vector<16x4xf32>
    %68 = arith.mulf %67, %67 : vector<16x4xf32>
    %cst_34 = arith.constant 0.000000e+00 : f32
    %69 = vector.broadcast %cst_34 : f32 to vector<16x4xf32>
    %70 = arith.subf %69, %66 : vector<16x4xf32>
    %71 = math.exp %70 : vector<16x4xf32>
    %72 = arith.mulf %68, %71 : vector<16x4xf32>
    %73 = arith.addf %72, %66 : vector<16x4xf32>
    %cst_35 = arith.constant 1.83787704 : f32
    %74 = vector.broadcast %cst_35 : f32 to vector<16x4xf32>
    %75 = arith.addf %73, %74 : vector<16x4xf32>
    %76 = vector.shape_cast %75 : vector<16x4xf32> to vector<1x16x4xf32>
    %cst_36 = arith.constant dense<0.000000e+00> : vector<1xf32>
    %77 = vector.multi_reduction <add>, %76, %cst_36 [1, 2] : vector<1x16x4xf32> to vector<1xf32>
    %78 = vector.shape_cast %77 : vector<1xf32> to vector<1x1x1xf32>
    %79 = vector.extract %78[0, 0, 0] : f32 from vector<1x1x1xf32>
    %cst_37 = arith.constant 5.000000e-01 : f32
    %80 = arith.mulf %cst_37, %79 : f32
    %cst_38 = arith.constant 1.562500e-02 : f32
    %81 = arith.mulf %80, %cst_38 : f32
    %c0_i32 = arith.constant 0 : i32
    %82 = arith.cmpi eq, %arg0, %c0_i32 : i32
    %83 = arith.extui %82 : i1 to i32
    %c0_i32_39 = arith.constant 0 : i32
    %84 = arith.cmpi ne, %83, %c0_i32_39 : i32
    scf.if %84 {
      %cst_44 = arith.constant 0.000000e+00 : f32
      %c0_45 = arith.constant 0 : index
      %c0_46 = arith.constant 0 : index
      %88 = memref.load %arg5[%c0_45, %c0_46] : memref<1x1xf32, #tpu.memory_space<smem>>
      memref.store %cst_44, %arg5[%c0_45, %c0_46] : memref<1x1xf32, #tpu.memory_space<smem>>
    } else {
    }
    %c0_40 = arith.constant 0 : index
    %c0_41 = arith.constant 0 : index
    %85 = memref.load %arg5[%c0_40, %c0_41] : memref<1x1xf32, #tpu.memory_space<smem>>
    %86 = arith.addf %85, %81 : f32
    %c0_42 = arith.constant 0 : index
    %c0_43 = arith.constant 0 : index
    %87 = memref.load %arg5[%c0_42, %c0_43] : memref<1x1xf32, #tpu.memory_space<smem>>
    memref.store %86, %arg5[%c0_42, %c0_43] : memref<1x1xf32, #tpu.memory_space<smem>>
    return
  }
  func.func @transform_0(%arg0: i32) -> (i32, i32) {
    %c0_i32 = arith.constant 0 : i32
    %c0_i32_0 = arith.constant 0 : i32
    return %arg0, %c0_i32 : i32, i32
  }
  func.func @transform_1(%arg0: i32) -> (i32, i32) {
    %c0_i32 = arith.constant 0 : i32
    %c0_i32_0 = arith.constant 0 : i32
    return %arg0, %c0_i32 : i32, i32
  }
  func.func @transform_2(%arg0: i32) -> (i32, i32) {
    %c0_i32 = arith.constant 0 : i32
    %c0_i32_0 = arith.constant 0 : i32
    %c0_i32_1 = arith.constant 0 : i32
    return %c0_i32, %c0_i32_0 : i32, i32
  }
  func.func @transform_3(%arg0: i32) -> (i32, i32) {
    %c0_i32 = arith.constant 0 : i32
    %c0_i32_0 = arith.constant 0 : i32
    %c0_i32_1 = arith.constant 0 : i32
    return %c0_i32, %c0_i32_0 : i32, i32
  }
  func.func @transform_4(%arg0: i32) -> (i32, i32) {
    %c0_i32 = arith.constant 0 : i32
    %c0_i32_0 = arith.constant 0 : i32
    %c0_i32_1 = arith.constant 0 : i32
    return %c0_i32, %c0_i32_0 : i32, i32
  }
}

</mosaic_0001>

<llo_original>
// kernel: _residualnet_loss_impl.1
$region0: #{_residualnet_loss_impl.1}
  #allocation0 [shape = 'u32[]', space=smem, size = 0x4, offset = 0x4, fixed_abs, tag = 'smem constant byte address 0x4 - core index']
  #allocation1 [shape = 'u32[144,128]{1,0:T(1,128)}', space=vmem, size = 0x12000, scoped, tag = 'internal scratch']
  %s0 = inlined_call_operand.vmem [shape: f32[64,8], index: 0, kind: input, shape index: {}]
  %s1 = inlined_call_operand.vmem [shape: f32[64,4], index: 1, kind: input, shape index: {}]
  %s2 = inlined_call_operand.vmem [shape: f32[168,128], index: 2, kind: input, shape index: {}]
  %s3 = inlined_call_operand.vmem [shape: f32[96,128], index: 3, kind: input, shape index: {}]
  %s4 = inlined_call_operand.hbm [shape: f32[1,1], index: 4, kind: output, shape index: {}]
  %s5 = sld [smem:[#allocation0]]
  $region53: #{_residualnet_loss_impl.1} parent=0
    _
  %s7 = ssub.s32 1, %s5
  %s8 = scalar_select 0, %s7, %s5
  $region1: #{_residualnet_loss_impl.1} parent=0
    #allocation2 [shape = 'u8[512]{0}', space=smem, size = 0x200, scoped, tag = 'output window, operand 0, single buffered']
    #allocation3 [shape = 's32[2]{0}', space=sflag, size = 0x8, scoped, tag = 'scoped memory for _residualnet_loss_impl.1']
    %9 = vsyncpa [#allocation3], 0
    loop: start=0, step=1, limit=6
    $region2: #{_residualnet_loss_impl.1} parent=1 // loop_pre_header
      _
    $region3: #{_residualnet_loss_impl.1} parent=1 // loop_header
      %s11 = sphi 0, %s15
      %p12 = scmp.ge.s32.totalorder %s11, 6
      %s21 = sphi 0, %s23
      %s24 = sphi 0, %s21
      %s25 = sphi 0, %s24
      %s41 = sphi 0, %s25
      %s47 = sphi 0, %s49
      %s50 = sphi 0, %s47
      %s51 = sphi 0, %s50
      %s67 = sphi 0, %s51
      %s71 = sphi 0, %s71
      %s73 = sphi 0, %s71
      %s74 = sphi 0, %s73
      %s88 = sphi 0, %s74
      %s92 = sphi 0, %s92
      %s94 = sphi 0, %s92
      %s95 = sphi 0, %s94
      %s109 = sphi 0, %s95
      %s113 = sphi 0, %s113
      %s115 = sphi 0, %s113
      %s116 = sphi 0, %s115
      %s130 = sphi 0, %s116
    $region4: #{_residualnet_loss_impl.1} parent=1 // loop_header_branch
      %14 = sbr.rel (%p12) target = $region8
    $region5: #{_residualnet_loss_impl.1} parent=1 // loop_body
      %s16 = ssub.s32 %s11, 1
      %s17 = ssub.s32 %s11, 2
      %s18 = sadd.s32 %s11, 1
      %s19 = ssub.s32 %s11, %s18
      %p20 = scmp.eq.s32.totalorder %s19, 0
      %s22 = sadd.s32 %s21, 1
      %s23 = scalar_select %p20, %s21, %s22
      %p26 = pneg %p20
      %p27 = scmp.eq.s32.totalorder %s11, 3
      %p28 = por %p26, %p27
      %p29 = scmp.ne.s32.totalorder %s21, %s24
      %p30 = scmp.eq.s32.totalorder %s11, 0
      %p31 = por %p29, %p30
      %p32 = scmp.ne.s32.totalorder %s21, %s24
      %p33 = scmp.eq.s32.totalorder %s16, 3
      %p34 = por %p32, %p33
      %p35 = scmp.ne.s32.totalorder %s24, %s25
      %p36 = scmp.eq.s32.totalorder %s16, 0
      %p37 = por %p35, %p36
      %p38 = scmp.ne.s32.totalorder %s24, %s25
      %p39 = scmp.eq.s32.totalorder %s17, 3
      %p40 = por %p38, %p39
      %p42 = scmp.ne.s32.totalorder %s25, %s41
      %p43 = scmp.eq.s32.totalorder %s17, 0
      %p44 = por %p42, %p43
      %s45 = ssub.s32 %s11, %s18
      %p46 = scmp.eq.s32.totalorder %s45, 0
      %s48 = sadd.s32 %s47, 1
      %s49 = scalar_select %p46, %s47, %s48
      %p52 = pneg %p46
      %p53 = scmp.eq.s32.totalorder %s11, 3
      %p54 = por %p52, %p53
      %p55 = scmp.ne.s32.totalorder %s47, %s50
      %p56 = scmp.eq.s32.totalorder %s11, 0
      %p57 = por %p55, %p56
      %p58 = scmp.ne.s32.totalorder %s47, %s50
      %p59 = scmp.eq.s32.totalorder %s16, 3
      %p60 = por %p58, %p59
      %p61 = scmp.ne.s32.totalorder %s50, %s51
      %p62 = scmp.eq.s32.totalorder %s16, 0
      %p63 = por %p61, %p62
      %p64 = scmp.ne.s32.totalorder %s50, %s51
      %p65 = scmp.eq.s32.totalorder %s17, 3
      %p66 = por %p64, %p65
      %p68 = scmp.ne.s32.totalorder %s51, %s67
      %p69 = scmp.eq.s32.totalorder %s17, 0
      %p70 = por %p68, %p69
      %s72 = sadd.s32 %s71, 1
      %p75 = scmp.eq.s32.totalorder %s11, 3
      %p76 = scmp.ne.s32.totalorder %s71, %s73
      %p77 = scmp.eq.s32.totalorder %s11, 0
      %p78 = por %p76, %p77
      %p79 = scmp.ne.s32.totalorder %s71, %s73
      %p80 = scmp.eq.s32.totalorder %s16, 3
      %p81 = por %p79, %p80
      %p82 = scmp.ne.s32.totalorder %s73, %s74
      %p83 = scmp.eq.s32.totalorder %s16, 0
      %p84 = por %p82, %p83
      %p85 = scmp.ne.s32.totalorder %s73, %s74
      %p86 = scmp.eq.s32.totalorder %s17, 3
      %p87 = por %p85, %p86
      %p89 = scmp.ne.s32.totalorder %s74, %s88
      %p90 = scmp.eq.s32.totalorder %s17, 0
      %p91 = por %p89, %p90
      %s93 = sadd.s32 %s92, 1
      %p96 = scmp.eq.s32.totalorder %s11, 3
      %p97 = scmp.ne.s32.totalorder %s92, %s94
      %p98 = scmp.eq.s32.totalorder %s11, 0
      %p99 = por %p97, %p98
      %p100 = scmp.ne.s32.totalorder %s92, %s94
      %p101 = scmp.eq.s32.totalorder %s16, 3
      %p102 = por %p100, %p101
      %p103 = scmp.ne.s32.totalorder %s94, %s95
      %p104 = scmp.eq.s32.totalorder %s16, 0
      %p105 = por %p103, %p104
      %p106 = scmp.ne.s32.totalorder %s94, %s95
      %p107 = scmp.eq.s32.totalorder %s17, 3
      %p108 = por %p106, %p107
      %p110 = scmp.ne.s32.totalorder %s95, %s109
      %p111 = scmp.eq.s32.totalorder %s17, 0
      %p112 = por %p110, %p111
      %s114 = sadd.s32 %s113, 1
      %p117 = scmp.eq.s32.totalorder %s11, 3
      %p118 = scmp.ne.s32.totalorder %s113, %s115
      %p119 = scmp.eq.s32.totalorder %s11, 0
      %p120 = por %p118, %p119
      %p121 = scmp.ne.s32.totalorder %s113, %s115
      %p122 = scmp.eq.s32.totalorder %s16, 3
      %p123 = por %p121, %p122
      %p124 = scmp.ne.s32.totalorder %s115, %s116
      %p125 = scmp.eq.s32.totalorder %s16, 0
      %p126 = por %p124, %p125
      %p127 = scmp.ne.s32.totalorder %s115, %s116
      %p128 = scmp.eq.s32.totalorder %s17, 3
      %p129 = por %p127, %p128
      %p131 = scmp.ne.s32.totalorder %s116, %s130
      %p132 = scmp.eq.s32.totalorder %s17, 0
      %p133 = por %p131, %p132
      %p134 = scmp.le.s32.totalorder 1, %s11
      %p135 = scmp.lt.s32.totalorder %s11, 5
      %p136 = pnand %p134, %p135
      %p137 = pneg %p136
      // Predicated region
      $region9: #{_residualnet_loss_impl.1} parent=5 // pred_check
        _
      $region10: #{_residualnet_loss_impl.1} parent=5 // pred_check_branch
        %139 = sbr.rel (%p136) target = $region12
      $region11: #{_residualnet_loss_impl.1} parent=5 // pred_region
        %s140 = ssub.s32 %s11, 1
        // Predicated region
        $region13: #{_residualnet_loss_impl.1} parent=11 // pred_check
          %p141 = pneg %p84
        $region14: #{_residualnet_loss_impl.1} parent=11 // pred_check_branch
          %143 = sbr.rel (%p141) target = $region16
        $region15: #{_residualnet_loss_impl.1} parent=11 // pred_region
          _
        $region16: #{_residualnet_loss_impl.1} parent=11 // pred_fallthru
          _
        // Predicated region
        $region17: #{_residualnet_loss_impl.1} parent=11 // pred_check
          %p144 = pneg %p105
        $region18: #{_residualnet_loss_impl.1} parent=11 // pred_check_branch
          %146 = sbr.rel (%p144) target = $region20
        $region19: #{_residualnet_loss_impl.1} parent=11 // pred_region
          _
        $region20: #{_residualnet_loss_impl.1} parent=11 // pred_fallthru
          _
      $region12: #{_residualnet_loss_impl.1} parent=5 // pred_fallthru
        _
      %p147 = scmp.lt.s32.totalorder %s11, 4
      // Predicated region
      $region21: #{_residualnet_loss_impl.1} parent=5 // pred_check
        %p148 = pneg %p147
      $region22: #{_residualnet_loss_impl.1} parent=5 // pred_check_branch
        %150 = sbr.rel (%p148) target = $region24
      $region23: #{_residualnet_loss_impl.1} parent=5 // pred_region
        // Predicated region
        $region25: #{_residualnet_loss_impl.1} parent=23 // pred_check
          %p151 = pneg %p31
        $region26: #{_residualnet_loss_impl.1} parent=23 // pred_check_branch
          %153 = sbr.rel (%p151) target = $region28
        $region27: #{_residualnet_loss_impl.1} parent=23 // pred_region
          %s154 = smul.u32 2, %s11
          %p155 = scmp.lt.s32.totalorder %s154, 7
          %s156 = scalar_select %p155, %s154, 7
          %s157 = smul.addr %s156, 8
          %s158 = scalar_lea.vmem %s0, %s157
          %s159 = smul.u32 2, %s11
        $region28: #{_residualnet_loss_impl.1} parent=23 // pred_fallthru
          _
        // Predicated region
        $region29: #{_residualnet_loss_impl.1} parent=23 // pred_check
          %p160 = pneg %p57
        $region30: #{_residualnet_loss_impl.1} parent=23 // pred_check_branch
          %162 = sbr.rel (%p160) target = $region32
        $region31: #{_residualnet_loss_impl.1} parent=23 // pred_region
          %s163 = smul.u32 2, %s11
          %p164 = scmp.lt.s32.totalorder %s163, 7
          %s165 = scalar_select %p164, %s163, 7
          %s166 = smul.addr %s165, 8
          %s167 = scalar_lea.vmem %s1, %s166
          %s168 = smul.u32 2, %s11
        $region32: #{_residualnet_loss_impl.1} parent=23 // pred_fallthru
          _
      $region24: #{_residualnet_loss_impl.1} parent=5 // pred_fallthru
        _
      %p169 = scmp.le.s32.totalorder 1, %s11
      %p170 = scmp.lt.s32.totalorder %s11, 5
      %p171 = pnand %p169, %p170
      %p172 = pneg %p171
      // Predicated region
      $region33: #{_residualnet_loss_impl.1} parent=5 // pred_check
        _
      $region34: #{_residualnet_loss_impl.1} parent=5 // pred_check_branch
        %174 = sbr.rel (%p171) target = $region36
      $region35: #{_residualnet_loss_impl.1} parent=5 // pred_region
        %s175 = ssub.s32 %s11, 1
        %s176 = smul.u32 2, %s16
        %p177 = scmp.lt.s32.totalorder %s176, 7
        %s178 = scalar_select %p177, %s176, 7
        %s179 = smul.addr %s178, 8
        %s180 = scalar_lea.vmem %s0, %s179
        %p181 = pneg %p37
        %p182 = pneg %p34
        %s183 = smul.u32 2, %s16
        %p184 = scmp.lt.s32.totalorder %s183, 7
        %s185 = scalar_select %p184, %s183, 7
        %s186 = smul.addr %s185, 8
        %s187 = scalar_lea.vmem %s1, %s186
        %p188 = pneg %p63
        %p189 = pneg %p60
        %p190 = pneg %p84
        %p191 = pneg %p81
        %p192 = pneg %p105
        %p193 = pneg %p102
        %p194 = pneg %p126
        %p195 = pneg %p123
        %s196 = smul.u32 2, %s16
        %p197 = scmp.lt.s32.totalorder %s196, 7
        %s198 = scalar_select %p197, %s196, 7
        %s199 = smul.addr %s198, 8
        %s200 = scalar_lea.vmem %s0, %s199
        %s201 = smul.u32 2, %s16
        %s202 = smul.u32 2, %s16
        %p203 = scmp.lt.s32.totalorder %s202, 7
        %s204 = scalar_select %p203, %s202, 7
        %s205 = smul.addr %s204, 8
        %s206 = scalar_lea.vmem %s1, %s205
        %s207 = smul.u32 2, %s16
        %v208 = vld [vmem:[%s200] sm:$0xff]
        %v209 = vld [vmem:[%s200 + $0x8] sm:$0xff]
        %v210 = vld [vmem:[%s206] sm:$0xff]
        %v211 = vld [vmem:[%s206 + $0x8] sm:$0xff]
        %v212 = vld [vmem:[%s2] sm:$0xff]
        %v213 = vld [vmem:[%s3] sm:$0xff]
        %v214 = vld [vmem:[%s3 + $0x8] sm:$0xff]
        %vm215 = vcmask 64512
        %v217 = vsel %vm215, %v208, 0
        %v220 = vsel %vm215, %v209, 0
        %222 = vmatprep.subr.mxu0 0.0
        %223 = vmatpush1.msra.mxu0 %v212
        %224 = vmatprep.subr.mxu0 0.0
        %225 = vmatpush1.msra.mxu0 0.0
        %226 = vmatprep.subr.mxu0 0.0
        %227 = vmatpush1.msra.mxu0 0.0
        %228 = vmatprep.subr.mxu0 0.0
        %229 = vmatpush1.msra.mxu0 0.0
        %230 = vmatprep.subr.mxu0 0.0
        %231 = vmatpush1.msra.mxu0 0.0
        %232 = vmatprep.subr.mxu0 0.0
        %233 = vmatpush1.msra.mxu0 0.0
        %234 = vmatprep.subr.mxu0 0.0
        %235 = vmatpush1.msra.mxu0 0.0
        %236 = vmatprep.subr.mxu0 0.0
        %237 = vmatpush1.msra.mxu0 0.0
        %238 = vmatprep.subr.mxu0 0.0
        %239 = vmatpush1.msra.mxu0 0.0
        %240 = vmatprep.subr.mxu0 0.0
        %241 = vmatpush1.msra.mxu0 0.0
        %242 = vmatprep.subr.mxu0 0.0
        %243 = vmatpush1.msra.mxu0 0.0
        %244 = vmatprep.subr.mxu0 0.0
        %245 = vmatpush1.msra.mxu0 0.0
        %246 = vmatprep.subr.mxu0 0.0
        %247 = vmatpush1.msra.mxu0 0.0
        %248 = vmatprep.subr.mxu0 0.0
        %249 = vmatpush1.msra.mxu0 0.0
        %250 = vmatprep.subr.mxu0 0.0
        %251 = vmatpush1.msra.mxu0 0.0
        %252 = vmatprep.subr.mxu0 0.0
        %253 = vmatpush1.msra.mxu0 0.0
        %254 = vmatprep.subr.mxu0 0.0
        %255 = vmatpush1.msra.mxu0 0.0
        %256 = vmatprep.subr.mxu0 0.0
        %257 = vmatpush1.msra.mxu0 0.0
        %258 = vmatprep.subr.mxu0 0.0
        %259 = vmatpush1.msra.mxu0 0.0
        %260 = vmatprep.subr.mxu0 0.0
        %261 = vmatpush1.msra.mxu0 0.0
        %262 = vmatprep.subr.mxu0 0.0
        %263 = vmatpush1.msra.mxu0 0.0
        %264 = vmatprep.subr.mxu0 0.0
        %265 = vmatpush1.msra.mxu0 0.0
        %266 = vmatprep.subr.mxu0 0.0
        %267 = vmatpush1.msra.mxu0 0.0
        %268 = vmatprep.subr.mxu0 0.0
        %269 = vmatpush1.msra.mxu0 0.0
        %270 = vmatprep.subr.mxu0 0.0
        %271 = vmatpush1.msra.mxu0 0.0
        %272 = vmatprep.subr.mxu0 0.0
        %273 = vmatpush1.msra.mxu0 0.0
        %274 = vmatprep.subr.mxu0 0.0
        %275 = vmatpush1.msra.mxu0 0.0
        %276 = vmatprep.subr.mxu0 0.0
        %277 = vmatpush1.msra.mxu0 0.0
        %278 = vmatprep.subr.mxu0 0.0
        %279 = vmatpush1.msra.mxu0 0.0
        %280 = vmatprep.subr.mxu0 0.0
        %281 = vmatpush1.msra.mxu0 0.0
        %282 = vmatprep.subr.mxu0 0.0
        %283 = vmatpush1.msra.mxu0 0.0
        %284 = vmatprep.subr.mxu0 0.0
        %285 = vmatpush1.msra.mxu0 0.0
        %286 = vmatprep.mubr.f32.mxu0 0.0
        %287 = vmatmul.mubr.f32.gmra.mrb[0].mxu0 %v217
        %v288 = vpop.f32.mrb[0].mxu0
        %v289 = vadd.f32 %v213, %v288
        %v290 = vpop.f32.mrb[0].mxu0
        %291 = vmatprep.mubr.f32.mxu0 0.0
        %292 = vmatmul.mubr.f32.gmra.mrb[0].mxu0 %v220
        %v293 = vpop.f32.mrb[0].mxu0
        %v294 = vadd.f32 %v214, %v293
        %v295 = vpop.f32.mrb[0].mxu0
        %296 = vdwg.mxu0
        %vm297 = vcmp.gt.f32.partialorder %v289, 0.0
        %vm298 = vcmp.gt.f32.partialorder %v294, 0.0
        %v299 = vmin.f32 %v289, 0.0
        %v300 = vmin.f32 %v294, 0.0
        %v301 = vmul.f32 %v299, 1.442695
        %v302 = vpow.pop %v301
        %v303 = vmul.f32 %v300, 1.442695
        %v304 = vpow.pop %v303
        %v305 = vsub.f32 %v302, 1.0
        %v306 = vsub.f32 %v304, 1.0
        %v307 = vsel %vm297, %v289, %v305
        %v308 = vsel %vm298, %v294, %v306
        %v309 = vld [vmem:[%s2 + $0x8] sm:$0xff]
        %v310 = vld [vmem:[%s2 + $0x10] sm:$0xff]
        %v311 = vld [vmem:[%s2 + $0x18] sm:$0xff]
        %v312 = vld [vmem:[%s2 + $0x20] sm:$0xff]
        %v313 = vld [vmem:[%s3 + $0x10] sm:$0xff]
        %v314 = vld [vmem:[%s3 + $0x18] sm:$0xff]
        %vm315 = vcmask 261120
        %v317 = vsel %vm315, %v307, 0
        %v320 = vsel %vm315, %v308, 0
        %322 = vmatprep.subr.mxu0 0.0
        %323 = vmatpush1.msra.mxu0 %v309
        %324 = vmatprep.subr.mxu0 0.0
        %325 = vmatpush1.msra.mxu0 %v310
        %326 = vmatprep.subr.mxu0 0.0
        %327 = vmatpush1.msra.mxu0 %v311
        %328 = vmatprep.subr.mxu0 0.0
        %329 = vmatpush1.msra.mxu0 %v312
        %330 = vmatprep.subr.mxu0 0.0
        %331 = vmatpush1.msra.mxu0 0.0
        %332 = vmatprep.subr.mxu0 0.0
        %333 = vmatpush1.msra.mxu0 0.0
        %334 = vmatprep.subr.mxu0 0.0
        %335 = vmatpush1.msra.mxu0 0.0
        %336 = vmatprep.subr.mxu0 0.0
        %337 = vmatpush1.msra.mxu0 0.0
        %338 = vmatprep.subr.mxu0 0.0
        %339 = vmatpush1.msra.mxu0 0.0
        %340 = vmatprep.subr.mxu0 0.0
        %341 = vmatpush1.msra.mxu0 0.0
        %342 = vmatprep.subr.mxu0 0.0
        %343 = vmatpush1.msra.mxu0 0.0
        %344 = vmatprep.subr.mxu0 0.0
        %345 = vmatpush1.msra.mxu0 0.0
        %346 = vmatprep.subr.mxu0 0.0
        %347 = vmatpush1.msra.mxu0 0.0
        %348 = vmatprep.subr.mxu0 0.0
        %349 = vmatpush1.msra.mxu0 0.0
        %350 = vmatprep.subr.mxu0 0.0
        %351 = vmatpush1.msra.mxu0 0.0
        %352 = vmatprep.subr.mxu0 0.0
        %353 = vmatpush1.msra.mxu0 0.0
        %354 = vmatprep.subr.mxu0 0.0
        %355 = vmatpush1.msra.mxu0 0.0
        %356 = vmatprep.subr.mxu0 0.0
        %357 = vmatpush1.msra.mxu0 0.0
        %358 = vmatprep.subr.mxu0 0.0
        %359 = vmatpush1.msra.mxu0 0.0
        %360 = vmatprep.subr.mxu0 0.0
        %361 = vmatpush1.msra.mxu0 0.0
        %362 = vmatprep.subr.mxu0 0.0
        %363 = vmatpush1.msra.mxu0 0.0
        %364 = vmatprep.subr.mxu0 0.0
        %365 = vmatpush1.msra.mxu0 0.0
        %366 = vmatprep.subr.mxu0 0.0
        %367 = vmatpush1.msra.mxu0 0.0
        %368 = vmatprep.subr.mxu0 0.0
        %369 = vmatpush1.msra.mxu0 0.0
        %370 = vmatprep.subr.mxu0 0.0
        %371 = vmatpush1.msra.mxu0 0.0
        %372 = vmatprep.subr.mxu0 0.0
        %373 = vmatpush1.msra.mxu0 0.0
        %374 = vmatprep.subr.mxu0 0.0
        %375 = vmatpush1.msra.mxu0 0.0
        %376 = vmatprep.subr.mxu0 0.0
        %377 = vmatpush1.msra.mxu0 0.0
        %378 = vmatprep.subr.mxu0 0.0
        %379 = vmatpush1.msra.mxu0 0.0
        %380 = vmatprep.subr.mxu0 0.0
        %381 = vmatpush1.msra.mxu0 0.0
        %382 = vmatprep.subr.mxu0 0.0
        %383 = vmatpush1.msra.mxu0 0.0
        %384 = vmatprep.subr.mxu0 0.0
        %385 = vmatpush1.msra.mxu0 0.0
        %386 = vmatprep.mubr.f32.mxu0 0.0
        %387 = vmatmul.mubr.f32.gmra.mrb[0].mxu0 %v317
        %v388 = vpop.f32.mrb[0].mxu0
        %v389 = vadd.f32 %v313, %v388
        %v390 = vpop.f32.mrb[0].mxu0
        %391 = vmatprep.mubr.f32.mxu0 0.0
        %392 = vmatmul.mubr.f32.gmra.mrb[0].mxu0 %v320
        %v393 = vpop.f32.mrb[0].mxu0
        %v394 = vadd.f32 %v314, %v393
        %v395 = vpop.f32.mrb[0].mxu0
        %396 = vdwg.mxu0
        %vm397 = vcmp.gt.f32.partialorder %v389, 0.0
        %vm398 = vcmp.gt.f32.partialorder %v394, 0.0
        %v399 = vmin.f32 %v389, 0.0
        %v400 = vmin.f32 %v394, 0.0
        %v401 = vmul.f32 %v399, 1.442695
        %v402 = vpow.pop %v401
        %v403 = vmul.f32 %v400, 1.442695
        %v404 = vpow.pop %v403
        %v405 = vsub.f32 %v402, 1.0
        %v406 = vsub.f32 %v404, 1.0
        %v407 = vsel %vm397, %v389, %v405
        %v408 = vsel %vm398, %v394, %v406
        %v409 = vld [vmem:[%s2 + $0x28] sm:$0xff]
        %v410 = vld [vmem:[%s2 + $0x30] sm:$0xff]
        %v411 = vld [vmem:[%s2 + $0x38] sm:$0xff]
        %v412 = vld [vmem:[%s2 + $0x40] sm:$0xff]
        %v413 = vld [vmem:[%s3 + $0x20] sm:$0xff]
        %v414 = vld [vmem:[%s3 + $0x28] sm:$0xff]
        %v416 = vsel %vm315, %v407, 0
        %v419 = vsel %vm315, %v408, 0
        %421 = vmatprep.subr.mxu0 0.0
        %422 = vmatpush1.msra.mxu0 %v409
        %423 = vmatprep.subr.mxu0 0.0
        %424 = vmatpush1.msra.mxu0 %v410
        %425 = vmatprep.subr.mxu0 0.0
        %426 = vmatpush1.msra.mxu0 %v411
        %427 = vmatprep.subr.mxu0 0.0
        %428 = vmatpush1.msra.mxu0 %v412
        %429 = vmatprep.subr.mxu0 0.0
        %430 = vmatpush1.msra.mxu0 0.0
        %431 = vmatprep.subr.mxu0 0.0
        %432 = vmatpush1.msra.mxu0 0.0
        %433 = vmatprep.subr.mxu0 0.0
        %434 = vmatpush1.msra.mxu0 0.0
        %435 = vmatprep.subr.mxu0 0.0
        %436 = vmatpush1.msra.mxu0 0.0
        %437 = vmatprep.subr.mxu0 0.0
        %438 = vmatpush1.msra.mxu0 0.0
        %439 = vmatprep.subr.mxu0 0.0
        %440 = vmatpush1.msra.mxu0 0.0
        %441 = vmatprep.subr.mxu0 0.0
        %442 = vmatpush1.msra.mxu0 0.0
        %443 = vmatprep.subr.mxu0 0.0
        %444 = vmatpush1.msra.mxu0 0.0
        %445 = vmatprep.subr.mxu0 0.0
        %446 = vmatpush1.msra.mxu0 0.0
        %447 = vmatprep.subr.mxu0 0.0
        %448 = vmatpush1.msra.mxu0 0.0
        %449 = vmatprep.subr.mxu0 0.0
        %450 = vmatpush1.msra.mxu0 0.0
        %451 = vmatprep.subr.mxu0 0.0
        %452 = vmatpush1.msra.mxu0 0.0
        %453 = vmatprep.subr.mxu0 0.0
        %454 = vmatpush1.msra.mxu0 0.0
        %455 = vmatprep.subr.mxu0 0.0
        %456 = vmatpush1.msra.mxu0 0.0
        %457 = vmatprep.subr.mxu0 0.0
        %458 = vmatpush1.msra.mxu0 0.0
        %459 = vmatprep.subr.mxu0 0.0
        %460 = vmatpush1.msra.mxu0 0.0
        %461 = vmatprep.subr.mxu0 0.0
        %462 = vmatpush1.msra.mxu0 0.0
        %463 = vmatprep.subr.mxu0 0.0
        %464 = vmatpush1.msra.mxu0 0.0
        %465 = vmatprep.subr.mxu0 0.0
        %466 = vmatpush1.msra.mxu0 0.0
        %467 = vmatprep.subr.mxu0 0.0
        %468 = vmatpush1.msra.mxu0 0.0
        %469 = vmatprep.subr.mxu0 0.0
        %470 = vmatpush1.msra.mxu0 0.0
        %471 = vmatprep.subr.mxu0 0.0
        %472 = vmatpush1.msra.mxu0 0.0
        %473 = vmatprep.subr.mxu0 0.0
        %474 = vmatpush1.msra.mxu0 0.0
        %475 = vmatprep.subr.mxu0 0.0
        %476 = vmatpush1.msra.mxu0 0.0
        %477 = vmatprep.subr.mxu0 0.0
        %478 = vmatpush1.msra.mxu0 0.0
        %479 = vmatprep.subr.mxu0 0.0
        %480 = vmatpush1.msra.mxu0 0.0
        %481 = vmatprep.subr.mxu0 0.0
        %482 = vmatpush1.msra.mxu0 0.0
        %483 = vmatprep.subr.mxu0 0.0
        %484 = vmatpush1.msra.mxu0 0.0
        %485 = vmatprep.mubr.f32.mxu0 0.0
        %486 = vmatmul.mubr.f32.gmra.mrb[0].mxu0 %v416
        %v487 = vpop.f32.mrb[0].mxu0
        %v488 = vadd.f32 %v413, %v487
        %v489 = vpop.f32.mrb[0].mxu0
        %490 = vmatprep.mubr.f32.mxu0 0.0
        %491 = vmatmul.mubr.f32.gmra.mrb[0].mxu0 %v419
        %v492 = vpop.f32.mrb[0].mxu0
        %v493 = vadd.f32 %v414, %v492
        %v494 = vpop.f32.mrb[0].mxu0
        %495 = vdwg.mxu0
        %v496 = vadd.f32 %v289, %v488
        %v497 = vadd.f32 %v294, %v493
        %vm498 = vcmp.gt.f32.partialorder %v496, 0.0
        %vm499 = vcmp.gt.f32.partialorder %v497, 0.0
        %v500 = vmin.f32 %v496, 0.0
        %v501 = vmin.f32 %v497, 0.0
        %v502 = vmul.f32 %v500, 1.442695
        %v503 = vpow.pop %v502
        %v504 = vmul.f32 %v501, 1.442695
        %v505 = vpow.pop %v504
        %v506 = vsub.f32 %v503, 1.0
        %v507 = vsub.f32 %v505, 1.0
        %v508 = vsel %vm498, %v496, %v506
        %v509 = vsel %vm499, %v497, %v507
        %v510 = vld [vmem:[%s2 + $0x48] sm:$0xff]
        %v511 = vld [vmem:[%s2 + $0x50] sm:$0xff]
        %v512 = vld [vmem:[%s2 + $0x58] sm:$0xff]
        %v513 = vld [vmem:[%s2 + $0x60] sm:$0xff]
        %v514 = vld [vmem:[%s3 + $0x30] sm:$0xff]
        %v515 = vld [vmem:[%s3 + $0x38] sm:$0xff]
        %v517 = vsel %vm315, %v508, 0
        %v520 = vsel %vm315, %v509, 0
        %522 = vmatprep.subr.mxu0 0.0
        %523 = vmatpush1.msra.mxu0 %v510
        %524 = vmatprep.subr.mxu0 0.0
        %525 = vmatpush1.msra.mxu0 %v511
        %526 = vmatprep.subr.mxu0 0.0
        %527 = vmatpush1.msra.mxu0 %v512
        %528 = vmatprep.subr.mxu0 0.0
        %529 = vmatpush1.msra.mxu0 %v513
        %530 = vmatprep.subr.mxu0 0.0
        %531 = vmatpush1.msra.mxu0 0.0
        %532 = vmatprep.subr.mxu0 0.0
        %533 = vmatpush1.msra.mxu0 0.0
        %534 = vmatprep.subr.mxu0 0.0
        %535 = vmatpush1.msra.mxu0 0.0
        %536 = vmatprep.subr.mxu0 0.0
        %537 = vmatpush1.msra.mxu0 0.0
        %538 = vmatprep.subr.mxu0 0.0
        %539 = vmatpush1.msra.mxu0 0.0
        %540 = vmatprep.subr.mxu0 0.0
        %541 = vmatpush1.msra.mxu0 0.0
        %542 = vmatprep.subr.mxu0 0.0
        %543 = vmatpush1.msra.mxu0 0.0
        %544 = vmatprep.subr.mxu0 0.0
        %545 = vmatpush1.msra.mxu0 0.0
        %546 = vmatprep.subr.mxu0 0.0
        %547 = vmatpush1.msra.mxu0 0.0
        %548 = vmatprep.subr.mxu0 0.0
        %549 = vmatpush1.msra.mxu0 0.0
        %550 = vmatprep.subr.mxu0 0.0
        %551 = vmatpush1.msra.mxu0 0.0
        %552 = vmatprep.subr.mxu0 0.0
        %553 = vmatpush1.msra.mxu0 0.0
        %554 = vmatprep.subr.mxu0 0.0
        %555 = vmatpush1.msra.mxu0 0.0
        %556 = vmatprep.subr.mxu0 0.0
        %557 = vmatpush1.msra.mxu0 0.0
        %558 = vmatprep.subr.mxu0 0.0
        %559 = vmatpush1.msra.mxu0 0.0
        %560 = vmatprep.subr.mxu0 0.0
        %561 = vmatpush1.msra.mxu0 0.0
        %562 = vmatprep.subr.mxu0 0.0
        %563 = vmatpush1.msra.mxu0 0.0
        %564 = vmatprep.subr.mxu0 0.0
        %565 = vmatpush1.msra.mxu0 0.0
        %566 = vmatprep.subr.mxu0 0.0
        %567 = vmatpush1.msra.mxu0 0.0
        %568 = vmatprep.subr.mxu0 0.0
        %569 = vmatpush1.msra.mxu0 0.0
        %570 = vmatprep.subr.mxu0 0.0
        %571 = vmatpush1.msra.mxu0 0.0
        %572 = vmatprep.subr.mxu0 0.0
        %573 = vmatpush1.msra.mxu0 0.0
        %574 = vmatprep.subr.mxu0 0.0
        %575 = vmatpush1.msra.mxu0 0.0
        %576 = vmatprep.subr.mxu0 0.0
        %577 = vmatpush1.msra.mxu0 0.0
        %578 = vmatprep.subr.mxu0 0.0
        %579 = vmatpush1.msra.mxu0 0.0
        %580 = vmatprep.subr.mxu0 0.0
        %581 = vmatpush1.msra.mxu0 0.0
        %582 = vmatprep.subr.mxu0 0.0
        %583 = vmatpush1.msra.mxu0 0.0
        %584 = vmatprep.subr.mxu0 0.0
        %585 = vmatpush1.msra.mxu0 0.0
        %586 = vmatprep.mubr.f32.mxu0 0.0
        %587 = vmatmul.mubr.f32.gmra.mrb[0].mxu0 %v517
        %v588 = vpop.f32.mrb[0].mxu0
        %v589 = vadd.f32 %v514, %v588
        %v590 = vpop.f32.mrb[0].mxu0
        %591 = vmatprep.mubr.f32.mxu0 0.0
        %592 = vmatmul.mubr.f32.gmra.mrb[0].mxu0 %v520
        %v593 = vpop.f32.mrb[0].mxu0
        %v594 = vadd.f32 %v515, %v593
        %v595 = vpop.f32.mrb[0].mxu0
        %596 = vdwg.mxu0
        %vm597 = vcmp.gt.f32.partialorder %v589, 0.0
        %vm598 = vcmp.gt.f32.partialorder %v594, 0.0
        %v599 = vmin.f32 %v589, 0.0
        %v600 = vmin.f32 %v594, 0.0
        %v601 = vmul.f32 %v599, 1.442695
        %v602 = vpow.pop %v601
        %v603 = vmul.f32 %v600, 1.442695
        %v604 = vpow.pop %v603
        %v605 = vsub.f32 %v602, 1.0
        %v606 = vsub.f32 %v604, 1.0
        %v607 = vsel %vm597, %v589, %v605
        %v608 = vsel %vm598, %v594, %v606
        %v609 = vld [vmem:[%s2 + $0x68] sm:$0xff]
        %v610 = vld [vmem:[%s2 + $0x70] sm:$0xff]
        %v611 = vld [vmem:[%s2 + $0x78] sm:$0xff]
        %v612 = vld [vmem:[%s2 + $0x80] sm:$0xff]
        %v613 = vld [vmem:[%s3 + $0x40] sm:$0xff]
        %v614 = vld [vmem:[%s3 + $0x48] sm:$0xff]
        %v616 = vsel %vm315, %v607, 0
        %v619 = vsel %vm315, %v608, 0
        %621 = vmatprep.subr.mxu0 0.0
        %622 = vmatpush1.msra.mxu0 %v609
        %623 = vmatprep.subr.mxu0 0.0
        %624 = vmatpush1.msra.mxu0 %v610
        %625 = vmatprep.subr.mxu0 0.0
        %626 = vmatpush1.msra.mxu0 %v611
        %627 = vmatprep.subr.mxu0 0.0
        %628 = vmatpush1.msra.mxu0 %v612
        %629 = vmatprep.subr.mxu0 0.0
        %630 = vmatpush1.msra.mxu0 0.0
        %631 = vmatprep.subr.mxu0 0.0
        %632 = vmatpush1.msra.mxu0 0.0
        %633 = vmatprep.subr.mxu0 0.0
        %634 = vmatpush1.msra.mxu0 0.0
        %635 = vmatprep.subr.mxu0 0.0
        %636 = vmatpush1.msra.mxu0 0.0
        %637 = vmatprep.subr.mxu0 0.0
        %638 = vmatpush1.msra.mxu0 0.0
        %639 = vmatprep.subr.mxu0 0.0
        %640 = vmatpush1.msra.mxu0 0.0
        %641 = vmatprep.subr.mxu0 0.0
        %642 = vmatpush1.msra.mxu0 0.0
        %643 = vmatprep.subr.mxu0 0.0
        %644 = vmatpush1.msra.mxu0 0.0
        %645 = vmatprep.subr.mxu0 0.0
        %646 = vmatpush1.msra.mxu0 0.0
        %647 = vmatprep.subr.mxu0 0.0
        %648 = vmatpush1.msra.mxu0 0.0
        %649 = vmatprep.subr.mxu0 0.0
        %650 = vmatpush1.msra.mxu0 0.0
        %651 = vmatprep.subr.mxu0 0.0
        %652 = vmatpush1.msra.mxu0 0.0
        %653 = vmatprep.subr.mxu0 0.0
        %654 = vmatpush1.msra.mxu0 0.0
        %655 = vmatprep.subr.mxu0 0.0
        %656 = vmatpush1.msra.mxu0 0.0
        %657 = vmatprep.subr.mxu0 0.0
        %658 = vmatpush1.msra.mxu0 0.0
        %659 = vmatprep.subr.mxu0 0.0
        %660 = vmatpush1.msra.mxu0 0.0
        %661 = vmatprep.subr.mxu0 0.0
        %662 = vmatpush1.msra.mxu0 0.0
        %663 = vmatprep.subr.mxu0 0.0
        %664 = vmatpush1.msra.mxu0 0.0
        %665 = vmatprep.subr.mxu0 0.0
        %666 = vmatpush1.msra.mxu0 0.0
        %667 = vmatprep.subr.mxu0 0.0
        %668 = vmatpush1.msra.mxu0 0.0
        %669 = vmatprep.subr.mxu0 0.0
        %670 = vmatpush1.msra.mxu0 0.0
        %671 = vmatprep.subr.mxu0 0.0
        %672 = vmatpush1.msra.mxu0 0.0
        %673 = vmatprep.subr.mxu0 0.0
        %674 = vmatpush1.msra.mxu0 0.0
        %675 = vmatprep.subr.mxu0 0.0
        %676 = vmatpush1.msra.mxu0 0.0
        %677 = vmatprep.subr.mxu0 0.0
        %678 = vmatpush1.msra.mxu0 0.0
        %679 = vmatprep.subr.mxu0 0.0
        %680 = vmatpush1.msra.mxu0 0.0
        %681 = vmatprep.subr.mxu0 0.0
        %682 = vmatpush1.msra.mxu0 0.0
        %683 = vmatprep.subr.mxu0 0.0
        %684 = vmatpush1.msra.mxu0 0.0
        %685 = vmatprep.mubr.f32.mxu0 0.0
        %686 = vmatmul.mubr.f32.gmra.mrb[0].mxu0 %v616
        %v687 = vpop.f32.mrb[0].mxu0
        %v688 = vadd.f32 %v613, %v687
        %v689 = vpop.f32.mrb[0].mxu0
        %690 = vmatprep.mubr.f32.mxu0 0.0
        %691 = vmatmul.mubr.f32.gmra.mrb[0].mxu0 %v619
        %v692 = vpop.f32.mrb[0].mxu0
        %v693 = vadd.f32 %v614, %v692
        %v694 = vpop.f32.mrb[0].mxu0
        %695 = vdwg.mxu0
        %v696 = vadd.f32 %v496, %v688
        %v697 = vadd.f32 %v497, %v693
        %v698 = vld [vmem:[%s2 + $0x88] sm:$0xff]
        %v699 = vld [vmem:[%s2 + $0x90] sm:$0xff]
        %v700 = vld [vmem:[%s2 + $0x98] sm:$0xff]
        %v701 = vld [vmem:[%s2 + $0xa0] sm:$0xff]
        %v702 = vld [vmem:[%s3 + $0x50] sm:$0xff]
        %v703 = vld [vmem:[%s3 + $0x58] sm:$0xff]
        %v705 = vsel %vm315, %v696, 0
        %v708 = vsel %vm315, %v697, 0
        %710 = vmatprep.subr.mxu0 0.0
        %711 = vmatpush1.msra.mxu0 %v698
        %712 = vmatprep.subr.mxu0 0.0
        %713 = vmatpush1.msra.mxu0 %v699
        %714 = vmatprep.subr.mxu0 0.0
        %715 = vmatpush1.msra.mxu0 %v700
        %716 = vmatprep.subr.mxu0 0.0
        %717 = vmatpush1.msra.mxu0 %v701
        %718 = vmatprep.subr.mxu0 0.0
        %719 = vmatpush1.msra.mxu0 0.0
        %720 = vmatprep.subr.mxu0 0.0
        %721 = vmatpush1.msra.mxu0 0.0
        %722 = vmatprep.subr.mxu0 0.0
        %723 = vmatpush1.msra.mxu0 0.0
        %724 = vmatprep.subr.mxu0 0.0
        %725 = vmatpush1.msra.mxu0 0.0
        %726 = vmatprep.subr.mxu0 0.0
        %727 = vmatpush1.msra.mxu0 0.0
        %728 = vmatprep.subr.mxu0 0.0
        %729 = vmatpush1.msra.mxu0 0.0
        %730 = vmatprep.subr.mxu0 0.0
        %731 = vmatpush1.msra.mxu0 0.0
        %732 = vmatprep.subr.mxu0 0.0
        %733 = vmatpush1.msra.mxu0 0.0
        %734 = vmatprep.subr.mxu0 0.0
        %735 = vmatpush1.msra.mxu0 0.0
        %736 = vmatprep.subr.mxu0 0.0
        %737 = vmatpush1.msra.mxu0 0.0
        %738 = vmatprep.subr.mxu0 0.0
        %739 = vmatpush1.msra.mxu0 0.0
        %740 = vmatprep.subr.mxu0 0.0
        %741 = vmatpush1.msra.mxu0 0.0
        %742 = vmatprep.subr.mxu0 0.0
        %743 = vmatpush1.msra.mxu0 0.0
        %744 = vmatprep.subr.mxu0 0.0
        %745 = vmatpush1.msra.mxu0 0.0
        %746 = vmatprep.subr.mxu0 0.0
        %747 = vmatpush1.msra.mxu0 0.0
        %748 = vmatprep.subr.mxu0 0.0
        %749 = vmatpush1.msra.mxu0 0.0
        %750 = vmatprep.subr.mxu0 0.0
        %751 = vmatpush1.msra.mxu0 0.0
        %752 = vmatprep.subr.mxu0 0.0
        %753 = vmatpush1.msra.mxu0 0.0
        %754 = vmatprep.subr.mxu0 0.0
        %755 = vmatpush1.msra.mxu0 0.0
        %756 = vmatprep.subr.mxu0 0.0
        %757 = vmatpush1.msra.mxu0 0.0
        %758 = vmatprep.subr.mxu0 0.0
        %759 = vmatpush1.msra.mxu0 0.0
        %760 = vmatprep.subr.mxu0 0.0
        %761 = vmatpush1.msra.mxu0 0.0
        %762 = vmatprep.subr.mxu0 0.0
        %763 = vmatpush1.msra.mxu0 0.0
        %764 = vmatprep.subr.mxu0 0.0
        %765 = vmatpush1.msra.mxu0 0.0
        %766 = vmatprep.subr.mxu0 0.0
        %767 = vmatpush1.msra.mxu0 0.0
        %768 = vmatprep.subr.mxu0 0.0
        %769 = vmatpush1.msra.mxu0 0.0
        %770 = vmatprep.subr.mxu0 0.0
        %771 = vmatpush1.msra.mxu0 0.0
        %772 = vmatprep.subr.mxu0 0.0
        %773 = vmatpush1.msra.mxu0 0.0
        %774 = vmatprep.mubr.f32.mxu0 0.0
        %775 = vmatmul.mubr.f32.gmra.mrb[0].mxu0 %v705
        %v776 = vpop.f32.mrb[0].mxu0
        %v777 = vadd.f32 %v702, %v776
        %v778 = vpop.f32.mrb[0].mxu0
        %779 = vmatprep.mubr.f32.mxu0 0.0
        %780 = vmatmul.mubr.f32.gmra.mrb[0].mxu0 %v708
        %v781 = vpop.f32.mrb[0].mxu0
        %v782 = vadd.f32 %v703, %v781
        %v783 = vpop.f32.mrb[0].mxu0
        %784 = vdwg.mxu0
        %v785 = vsub.f32 %v210, %v777
        %v786 = vsub.f32 %v211, %v782
        %v787 = vmul.f32 %v785, %v785
        %v788 = vmul.f32 %v786, %v786
        %v789 = vsub.f32 0.0, %v777
        %v790 = vsub.f32 0.0, %v782
        %v791 = vmul.f32 %v789, 1.442695
        %v792 = vpow.pop %v791
        %v793 = vmul.f32 %v790, 1.442695
        %v794 = vpow.pop %v793
        %797 = vrot.lane.b32.xlu0 %v792, 124
        %v798 = vpop.permute.xlu0 %797
        %799 = vrot.lane.b32.xlu0 %v794, 124
        %v800 = vpop.permute.xlu0 %799
        %v803 = vmul.f32 %v787, %v798
        %v804 = vmul.f32 %v788, %v800
        %807 = vrot.lane.b32.xlu0 %v777, 124
        %v808 = vpop.permute.xlu0 %807
        %809 = vrot.lane.b32.xlu0 %v782, 124
        %v810 = vpop.permute.xlu0 %809
        %v813 = vadd.f32 %v803, %v808
        %v814 = vadd.f32 %v804, %v810
        %v815 = vadd.f32 %v813, 1.837877
        %v816 = vadd.f32 %v814, 1.837877
        %vm817 = vcmask 31744
        %v818 = vsel %vm817, %v815, 0.0
        %v819 = vsel %vm817, %v816, 0.0
        %v820 = vadd.f32 %v818, %v819
        %821 = vadd.xlane.f32.xlu0 %v820
        %v822 = vpop.xlane.xlu0 %821
        %v823 = vrot.slane %v822, 4
        %v824 = vadd.f32 %v822, %v823
        %v825 = vrot.slane %v824, 2
        %v826 = vadd.f32 %v824, %v825
        %v827 = vrot.slane %v826, 1
        %v828 = vadd.f32 %v826, %v827
        %s829 = vtos %v828
        %s830 = smul.f32 %s829, 0.5
        %s831 = smul.f32 %s830, 0.015625
        %p832 = scmp.eq.s32.totalorder %s16, 0
        // Predicated region
        $region37: #{_residualnet_loss_impl.1} parent=35 // pred_check
          %p833 = pneg %p832
        $region38: #{_residualnet_loss_impl.1} parent=35 // pred_check_branch
          %835 = sbr.rel (%p833) target = $region40
        $region39: #{_residualnet_loss_impl.1} parent=35 // pred_region
          %s836 = scalar_lea.smem [#allocation2], 0
          %837 = sst [smem:[%s836]] 0.0
        $region40: #{_residualnet_loss_impl.1} parent=35 // pred_fallthru
          _
        %s838 = sld [smem:[#allocation2]]
        %s839 = sadd.f32 %s838, %s831
        %s840 = scalar_lea.smem [#allocation2], 0
        %841 = sst [smem:[%s840]] %s839
        // Predicated region
        $region41: #{_residualnet_loss_impl.1} parent=35 // pred_check
          %p842 = pneg %p123
        $region42: #{_residualnet_loss_impl.1} parent=35 // pred_check_branch
          %844 = sbr.rel (%p842) target = $region44
        $region43: #{_residualnet_loss_impl.1} parent=35 // pred_region
          %s846 = ssub.s32 16, 16
          %847 = vsyncadd [#allocation3], %s846
          %850 = dma.smem_to_hbm [#allocation2], 16, %s4, [#allocation3]
        $region44: #{_residualnet_loss_impl.1} parent=35 // pred_fallthru
          _
        // Predicated region
        $region45: #{_residualnet_loss_impl.1} parent=35 // pred_check
          %p851 = pneg %p123
        $region46: #{_residualnet_loss_impl.1} parent=35 // pred_check_branch
          %853 = sbr.rel (%p851) target = $region48
        $region47: #{_residualnet_loss_impl.1} parent=35 // pred_region
          %854 = dma.done [#allocation3], 16
        $region48: #{_residualnet_loss_impl.1} parent=35 // pred_fallthru
          _
        %855 = sfence
      $region36: #{_residualnet_loss_impl.1} parent=5 // pred_fallthru
        _
      %p856 = scmp.le.s32.totalorder 2, %s11
      // Predicated region
      $region49: #{_residualnet_loss_impl.1} parent=5 // pred_check
        %p857 = pneg %p856
      $region50: #{_residualnet_loss_impl.1} parent=5 // pred_check_branch
        %859 = sbr.rel (%p857) target = $region52
      $region51: #{_residualnet_loss_impl.1} parent=5 // pred_region
        %s860 = ssub.s32 %s11, 2
      $region52: #{_residualnet_loss_impl.1} parent=5 // pred_fallthru
        _
    $region6: #{_residualnet_loss_impl.1} parent=1 // loop_footer
      %s15 = sadd.s32 1, %s11
    $region7: #{_residualnet_loss_impl.1} parent=1 // loop_footer_branch
      %10 = sbr.rel target = $region3
    $region8: #{_residualnet_loss_impl.1} parent=1 // loop_exit
      _
    %861 = vsyncpa [#allocation3], 1
    %s862 = scalar_lea.sflag [#allocation3], 1
    %863 = vsyncpa %s862, 1

</llo_original>
